<compile_context>
chip_gen: v6e
topology: v6e:2x2x1
jax: 0.10.0
libtpu: 0.0.40
codegen_flags: <defaults>
</compile_context>

<pallas_src>
import jax
import jax.numpy as jnp
from jax import lax
from jax.experimental import pallas as pl
from jax.experimental.pallas import tpu as pltpu


def _round_up(x: int, m: int) -> int:
    return ((x + m - 1) // m) * m


def _sublane_multiple(dtype) -> int:
    """Native sublane tile for a dtype: 8 (f32), 16 (bf16), 32 (int8/fp8)."""
    itemsize = jnp.dtype(dtype).itemsize
    return max(8, (8 * 4) // max(1, itemsize))


def _default_table_budget_bytes() -> int:
    """VMEM budget for keeping the whole table resident (double-buffered)."""
    try:
        info = pltpu.get_tpu_info()
        vmem = getattr(info, "vmem_capacity_bytes", None)
        if vmem:
            # ~1/8 of physical VMEM: 8 MiB on v7x (64 MiB), 16 MiB on
            # v5e/v6e (128 MiB).  Leaves room for the 2x pipeline buffers of
            # the table, the out/idx blocks and the one-hot intermediate.
            return int(min(max(vmem // 8, 4 << 20), 16 << 20))
    except Exception:
        pass
    return 8 << 20


# ---------------------------------------------------------------------------
# Fast path: VMEM-resident table, one-hot MXU gather, row-tiled grid.
# ---------------------------------------------------------------------------
def _one_hot_gather_kernel(idx_ref, table_ref, out_ref):
    """out[r, :] = table[idx[r], :] via one_hot(idx) @ table on the MXU.

    idx_ref:   (tn, 1)   int32 row-tile of flat indices
    table_ref: (v_pad, E) whole (padded) embedding table, VMEM-resident
    out_ref:   (tn, E)   output row-tile
    """
    tn = idx_ref.shape[0]
    tv = table_ref.shape[0]
    col = lax.broadcasted_iota(jnp.int32, (tn, tv), 1)
    one_hot = (col == idx_ref[...]).astype(table_ref.dtype)      # (tn, tv)
    # Exact: each row of one_hot selects exactly one table row.
    out_ref[...] = jnp.dot(one_hot, table_ref[...],
                           preferred_element_type=jnp.float32
                           ).astype(out_ref.dtype)


def _resident_table_gather(flat_idx, table, n, V, E):
    dtype = table.dtype
    itemsize = jnp.dtype(dtype).itemsize
    sub = _sublane_multiple(dtype)              # also a multiple of 8 (int32 idx)

    v_pad = _round_up(V, sub)
    if v_pad != V:
        # Padded rows are never selected (indices clamped < V), so zeros are inert.
        table = jnp.pad(table, ((0, v_pad - V), (0, 0)))

    # Row tile: amortize per-step overhead, keep (tn,E) out block <= ~2 MiB
    # (double-buffered) and the (tn, v_pad) one-hot intermediate <= ~4 MiB.
    out_target = 2 << 20
    onehot_target = 4 << 20
    tn_cap = min(1024,
                 max(1, out_target // max(1, E * itemsize)),
                 max(1, onehot_target // max(1, v_pad * itemsize)))
    tn = max(sub, (tn_cap // sub) * sub)
    tn = min(tn, _round_up(n, sub))
    n_pad = _round_up(n, tn)

    idx2d = jnp.pad(flat_idx, (0, n_pad - n)).reshape(n_pad, 1)

    # VMEM estimate: table (2x pipeline buffers) + out (2x) + idx (2x) +
    # one-hot intermediate + slack.  Raise the scoped limit accordingly
    # (48 MiB cap keeps headroom on v7x's 64 MiB physical VMEM).
    est = (2 * v_pad * E * itemsize + 2 * tn * E * itemsize
           + 2 * tn * 4 + tn * v_pad * itemsize + (2 << 20))
    vmem_limit = int(min(max(est, 32 << 20), 48 << 20))

    out = pl.pallas_call(
        _one_hot_gather_kernel,
        out_shape=jax.ShapeDtypeStruct((n_pad, E), dtype),
        grid_spec=pltpu.PrefetchScalarGridSpec(
            num_scalar_prefetch=0,
            grid=(n_pad // tn,),
            in_specs=[
                pl.BlockSpec((tn, 1), lambda r: (r, 0)),        # index row-tile
                pl.BlockSpec((v_pad, E), lambda r: (0, 0)),     # resident table
            ],
            out_specs=pl.BlockSpec((tn, E), lambda r: (r, 0)),
        ),
        compiler_params=pltpu.CompilerParams(
            dimension_semantics=("parallel",),   # independent row tiles; megacore
            vmem_limit_bytes=vmem_limit,
        ),
    )(idx2d, table)
    return out[:n]


# ---------------------------------------------------------------------------
# Large-table fallback: scalar-prefetched indices + manual per-row DMA gather.
# HBM traffic ~ n*E bytes (not V*E) and no one-hot MACs.
# ---------------------------------------------------------------------------
def _dma_gather_kernel(idx_ref, table_hbm, out_ref, stage_ref, sems):
    """Gather `tn` table rows per grid step with overlapped row DMAs.

    idx_ref:   (n_pad,) int32 in SMEM (scalar-prefetched flat indices)
    table_hbm: (V, E) table left in HBM (memory_space=pl.ANY)
    out_ref:   (tn, E) output row-tile (VMEM)
    stage_ref: (tn, E) VMEM staging buffer
    sems:      (tn,)   DMA semaphores
    """
    i = pl.program_id(0)
    tn = out_ref.shape[0]
    # Issue all row DMAs, then wait; the DMA engine overlaps them.
    for r in range(tn):
        row = idx_ref[i * tn + r]
        pltpu.make_async_copy(table_hbm.at[row], stage_ref.at[r],
                              sems.at[r]).start()
    for r in range(tn):
        pltpu.make_async_copy(table_hbm.at[0], stage_ref.at[r],
                              sems.at[r]).wait()
    out_ref[...] = stage_ref[...]


def _hbm_dma_gather(flat_idx, table, n, E):
    dtype = table.dtype
    rows_per_step = 32                      # multiple of 8/16/32 sublane tiles
    n_pad = _round_up(n, rows_per_step)
    idx1d = jnp.pad(flat_idx, (0, n_pad - n))   # pad with 0 (a valid row)

    out = pl.pallas_call(
        _dma_gather_kernel,
        out_shape=jax.ShapeDtypeStruct((n_pad, E), dtype),
        grid_spec=pltpu.PrefetchScalarGridSpec(
            num_scalar_prefetch=1,
            grid=(n_pad // rows_per_step,),
            in_specs=[pl.BlockSpec(memory_space=pl.ANY)],       # table in HBM
            out_specs=pl.BlockSpec((rows_per_step, E),
                                   lambda i, idx_ref: (i, 0)),
            scratch_shapes=[
                pltpu.VMEM((rows_per_step, E), dtype),
                pltpu.SemaphoreType.DMA((rows_per_step,)),
            ],
        ),
        compiler_params=pltpu.CompilerParams(
            dimension_semantics=("arbitrary",),
        ),
    )(idx1d, table)
    return out[:n]


# ---------------------------------------------------------------------------
# Public wrapper (== TimeEmbedding.forward)
# ---------------------------------------------------------------------------
def time_embedding(timesteps, embed_table, *, vmem_table_budget_bytes=None):
    """timesteps: (B, T, 1) int, embed_table: (V, E) -> (B, T, E)."""
    B, T, _ = timesteps.shape
    V, E = embed_table.shape
    n = B * T

    if vmem_table_budget_bytes is None:
        vmem_table_budget_bytes = _default_table_budget_bytes()

    # Clamp indices so a bad timestep can never read outside the table.
    # TODO(synk): PyTorch nn.Embedding raises on out-of-range indices; here
    # they are silently clamped to [0, V-1].
    flat_idx = jnp.clip(timesteps.reshape(n).astype(jnp.int32), 0, V - 1)

    table_bytes = V * E * jnp.dtype(embed_table.dtype).itemsize
    if table_bytes <= vmem_table_budget_bytes:
        out = _resident_table_gather(flat_idx, embed_table, n, V, E)
    else:
        out = _hbm_dma_gather(flat_idx, embed_table, n, E)

    return out.reshape(B, T, E)


if __name__ == "__main__":
    # Small shapes consistent with the module's forward.
    B, T = 2, 8
    max_ep_len = 16
    plm_embed_size = 32          # E
    V = max_ep_len + 1

    key = jax.random.PRNGKey(0)
    k_table, k_idx = jax.random.split(key)

    # nn.Embedding default weight init is N(0, 1).
    embed_table = jax.random.normal(k_table, (V, plm_embed_size),
                                    dtype=jnp.float32)
    # timesteps: (B, T, 1) int indices in [0, max_ep_len]
    timesteps = jax.random.randint(k_idx, (B, T, 1), 0, V, dtype=jnp.int32)

    # Reference: plain JAX gather == torch nn.Embedding lookup + squeeze(2).
    ref = embed_table[timesteps.squeeze(-1)]

    # 1) Fast path: VMEM-resident table + one-hot MXU gather.
    out = jax.block_until_ready(time_embedding(timesteps, embed_table))
    assert out.shape == (B, T, plm_embed_size), out.shape
    assert jnp.allclose(out, ref), "resident-table path mismatch vs reference"

    # 2) Force the large-table fallback (scalar-prefetch + manual DMA gather).
    out2 = jax.block_until_ready(
        time_embedding(timesteps, embed_table, vmem_table_budget_bytes=0))
    assert out2.shape == (B, T, plm_embed_size), out2.shape
    assert jnp.allclose(out2, ref), "DMA-gather path mismatch vs reference"

    print("KERNEL_OK")
</pallas_src>

<mosaic_0001>
module attributes {stable_mosaic.version = 11 : i64} {
  func.func @_one_hot_gather_kernel(%arg0: i32, %arg1: memref<16x1xi32, #tpu.memory_space<vmem>>, %arg2: memref<24x32xf32, #tpu.memory_space<vmem>>, %arg3: memref<16x32xf32, #tpu.memory_space<vmem>>) attributes {dimension_semantics = [#tpu.dimension_semantics<parallel>], iteration_bounds = array<i64: 1>, scalar_prefetch = 0 : i64, scratch_operands = 0 : i64, tpu.core_type = #tpu.core_type<tc>, window_params = [{transform_indices = @transform_0, window_bounds = array<i64: 16, 1>}, {pipeline_mode = #tpu.pipeline_mode<synchronous>, transform_indices = @transform_1, window_bounds = array<i64: 24, 32>}, {transform_indices = @transform_2, window_bounds = array<i64: 16, 32>}]} {
    %0 = tpu.iota {dimensions = array<i32: 1>} : vector<16x24xi32>
    %c0 = arith.constant 0 : index
    %c0_0 = arith.constant 0 : index
    %1 = vector.load %arg1[%c0, %c0_0] : memref<16x1xi32, #tpu.memory_space<vmem>>, vector<16x1xi32>
    %2 = vector.broadcast %1 : vector<16x1xi32> to vector<16x24xi32>
    %3 = arith.cmpi eq, %0, %2 : vector<16x24xi32>
    %4 = arith.extui %3 : vector<16x24xi1> to vector<16x24xi32>
    %5 = arith.sitofp %4 : vector<16x24xi32> to vector<16x24xf32>
    %c0_1 = arith.constant 0 : index
    %c0_2 = arith.constant 0 : index
    %6 = vector.load %arg2[%c0_1, %c0_2] : memref<24x32xf32, #tpu.memory_space<vmem>>, vector<24x32xf32>
    %cst = arith.constant dense<0.000000e+00> : vector<16x32xf32>
    %7 = tpu.matmul %5, %6, %cst {dimension_numbers = #tpu.dot_dimension_numbers<[1], [0], [0], [1], [0, 0, 1, 1], [], []>} : vector<16x24xf32>, vector<24x32xf32>, vector<16x32xf32> -> vector<16x32xf32>
    %c0_3 = arith.constant 0 : index
    %c0_4 = arith.constant 0 : index
    %8 = vector.load %arg3[%c0_3, %c0_4] : memref<16x32xf32, #tpu.memory_space<vmem>>, vector<16x32xf32>
    tpu.vector_store %arg3[%c0_3, %c0_4], %7 {strides = array<i32>} : memref<16x32xf32, #tpu.memory_space<vmem>>, vector<16x32xf32>,
    return
  }
  func.func @transform_0(%arg0: i32) -> (i32, i32) {
    %c0_i32 = arith.constant 0 : i32
    %c0_i32_0 = arith.constant 0 : i32
    return %arg0, %c0_i32 : i32, i32
  }
  func.func @transform_1(%arg0: i32) -> (i32, i32) {
    %c0_i32 = arith.constant 0 : i32
    %c0_i32_0 = arith.constant 0 : i32
    %c0_i32_1 = arith.constant 0 : i32
    return %c0_i32, %c0_i32_0 : i32, i32
  }
  func.func @transform_2(%arg0: i32) -> (i32, i32) {
    %c0_i32 = arith.constant 0 : i32
    %c0_i32_0 = arith.constant 0 : i32
    return %arg0, %c0_i32 : i32, i32
  }
}

</mosaic_0001>

<llo_original>
// kernel: tpu_custom_call.1
$region0: #{tpu_custom_call.1}
  #allocation0 [shape = 'u32[]', space=smem, size = 0x4, offset = 0x4, fixed_abs, tag = 'smem constant byte address 0x4 - core index']
  #allocation1 [shape = 'u32[144,128]{1,0:T(1,128)}', space=vmem, size = 0x12000, scoped, tag = 'internal scratch']
  %s0 = inlined_call_operand.vmem [shape: s32[16,1], index: 0, kind: input, shape index: {}]
  %s1 = inlined_call_operand.hbm [shape: f32[24,32], index: 1, kind: input, shape index: {}]
  %s2 = inlined_call_operand.hbm [shape: f32[16,32], index: 2, kind: output, shape index: {}]
  %s3 = sld [smem:[#allocation0]]
  $region22: #{tpu_custom_call.1} parent=0
    _
  %s5 = ssub.s32 1, %s3
  %s6 = scalar_select 0, %s5, %s3
  $region1: #{tpu_custom_call.1} parent=0
    #allocation2 [shape = 'u8[12288]{0}', space=vmem, size = 0x3000, scoped, tag = 'input window, operand 1, single buffered']
    #allocation3 [shape = 's32[1]{0}', space=sflag, size = 0x4, scoped, tag = 'scoped memory for tpu_custom_call.1']
    #allocation4 [shape = 's32[1]{0}', space=sflag, size = 0x4, scoped, tag = 'scoped memory for tpu_custom_call.1']
    #allocation5 [shape = 'u8[8192]{0}', space=vmem, size = 0x2000, scoped, tag = 'output window, operand 0, single buffered']
    %7 = vsyncpa [#allocation3], 0
    %8 = vsyncpa [#allocation4], 0
    // Predicated region
    $region2: #{tpu_custom_call.1} parent=1 // pred_check
      _
    $region3: #{tpu_custom_call.1} parent=1 // pred_check_branch
      %10 = sbr.rel (0) target = $region5
    $region4: #{tpu_custom_call.1} parent=1 // pred_region
      _
    $region5: #{tpu_custom_call.1} parent=1 // pred_fallthru
      _
    // Predicated region
    $region6: #{tpu_custom_call.1} parent=1 // pred_check
      _
    $region7: #{tpu_custom_call.1} parent=1 // pred_check_branch
      %12 = sbr.rel (0) target = $region9
    $region8: #{tpu_custom_call.1} parent=1 // pred_region
      %s14 = ssub.s32 384, 384
      %15 = vsyncadd [#allocation3], %s14
      %s16 = sshll.u32 [#allocation2], 4
      %s17 = int_to_ptr.vmem [resolvable:$true] %s16
      %22 = dma.hbm_to_vmem [thread:$0]  %s1, 384, %s17, [#allocation3], 128, 128, 8
    $region9: #{tpu_custom_call.1} parent=1 // pred_fallthru
      _
    // Predicated region
    $region10: #{tpu_custom_call.1} parent=1 // pred_check
      _
    $region11: #{tpu_custom_call.1} parent=1 // pred_check_branch
      %24 = sbr.rel (0) target = $region13
    $region12: #{tpu_custom_call.1} parent=1 // pred_region
      %25 = dma.done [#allocation3], 384
    $region13: #{tpu_custom_call.1} parent=1 // pred_fallthru
      _
    %v26 = vlaneseq
    %v27 = vand.u32 %v26, 127
    %v28 = vld [vmem:[%s0] sm:$0xff]
    %v29 = vld [vmem:[%s0 + $0x8] sm:$0xff]
    %30 = vset.pattern.permute.xlu0 0
    %31 = vperm.xlu0 %30, %v28
    %v32 = vpop.permute.xlu0 %31
    %33 = vset.pattern.permute.xlu0 0
    %34 = vperm.xlu0 %33, %v29
    %v35 = vpop.permute.xlu0 %34
    %vm36 = vcmp.eq.s32.totalorder %v27, %v32
    %vm37 = vcmp.eq.s32.totalorder %v27, %v35
    %v38 = vsel %vm36, 1, 0
    %v39 = vsel %vm37, 1, 0
    %v40 = vcvt.s32.f32 %v38
    %v41 = vcvt.s32.f32 %v39
    %v42 = vld [vmem:[#allocation2] sm:$0xff]
    %v43 = vld [vmem:[#allocation2 + $0x8] sm:$0xff]
    %v44 = vld [vmem:[#allocation2 + $0x10] sm:$0xff]
    %vm45 = vcmask 195584
    %v47 = vsel %vm45, %v40, 0
    %v50 = vsel %vm45, %v41, 0
    %52 = vmatprep.subr.mxu0 0.0
    %53 = vmatpush1.msra.mxu0 0.0
    %54 = vmatprep.subr.mxu0 0.0
    %55 = vmatpush1.msra.mxu0 0.0
    %56 = vmatprep.subr.mxu0 0.0
    %57 = vmatpush1.msra.mxu0 0.0
    %58 = vmatprep.subr.mxu0 0.0
    %59 = vmatpush1.msra.mxu0 0.0
    %60 = vmatprep.subr.mxu0 0.0
    %61 = vmatpush1.msra.mxu0 0.0
    %62 = vmatprep.subr.mxu0 0.0
    %63 = vmatpush1.msra.mxu0 0.0
    %64 = vmatprep.subr.mxu0 0.0
    %65 = vmatpush1.msra.mxu0 0.0
    %66 = vmatprep.subr.mxu0 0.0
    %67 = vmatpush1.msra.mxu0 0.0
    %68 = vmatprep.subr.mxu0 0.0
    %69 = vmatpush1.msra.mxu0 0.0
    %70 = vmatprep.subr.mxu0 0.0
    %71 = vmatpush1.msra.mxu0 0.0
    %72 = vmatprep.subr.mxu0 0.0
    %73 = vmatpush1.msra.mxu0 0.0
    %74 = vmatprep.subr.mxu0 0.0
    %75 = vmatpush1.msra.mxu0 0.0
    %76 = vmatprep.subr.mxu0 0.0
    %77 = vmatpush1.msra.mxu0 0.0
    %78 = vmatprep.subr.mxu0 0.0
    %79 = vmatpush1.msra.mxu0 %v44
    %80 = vmatprep.subr.mxu0 0.0
    %81 = vmatpush1.msra.mxu0 %v43
    %82 = vmatprep.subr.mxu0 0.0
    %83 = vmatpush1.msra.mxu0 %v42
    %84 = vmatprep.subr.mxu0 0.0
    %85 = vmatpush2.msra.mxu0 0.0
    %86 = vmatprep.subr.mxu0 0.0
    %87 = vmatpush2.msra.mxu0 0.0
    %88 = vmatprep.subr.mxu0 0.0
    %89 = vmatpush2.msra.mxu0 0.0
    %90 = vmatprep.subr.mxu0 0.0
    %91 = vmatpush2.msra.mxu0 0.0
    %92 = vmatprep.subr.mxu0 0.0
    %93 = vmatpush2.msra.mxu0 0.0
    %94 = vmatprep.subr.mxu0 0.0
    %95 = vmatpush2.msra.mxu0 0.0
    %96 = vmatprep.subr.mxu0 0.0
    %97 = vmatpush2.msra.mxu0 0.0
    %98 = vmatprep.subr.mxu0 0.0
    %99 = vmatpush2.msra.mxu0 0.0
    %100 = vmatprep.subr.mxu0 0.0
    %101 = vmatpush2.msra.mxu0 0.0
    %102 = vmatprep.subr.mxu0 0.0
    %103 = vmatpush2.msra.mxu0 0.0
    %104 = vmatprep.subr.mxu0 0.0
    %105 = vmatpush2.msra.mxu0 0.0
    %106 = vmatprep.subr.mxu0 0.0
    %107 = vmatpush2.msra.mxu0 0.0
    %108 = vmatprep.subr.mxu0 0.0
    %109 = vmatpush2.msra.mxu0 0.0
    %110 = vmatprep.subr.mxu0 0.0
    %111 = vmatpush2.msra.mxu0 0.0
    %112 = vmatprep.subr.mxu0 0.0
    %113 = vmatpush2.msra.mxu0 0.0
    %114 = vmatprep.subr.mxu0 0.0
    %115 = vmatpush2.msra.mxu0 0.0
    %116 = vmatprep.mubr.f32.mxu0 0.0
    %117 = vmatmul.mubr.f32.gmra.mxu0 %v47
    %v118 = vpop.f32.mrf.mxu0
    %v119 = vadd.f32 0.0, %v118
    %v120 = vpop.f32.mrf.mxu0
    %121 = vmatprep.mubr.f32.mxu0 0.0
    %122 = vmatmul.mubr.f32.gmra.mxu0 %v50
    %v123 = vpop.f32.mrf.mxu0
    %v124 = vadd.f32 0.0, %v123
    %v125 = vpop.f32.mrf.mxu0
    %126 = vdwg.mxu0
    %vm127 = vcmask 261120
    %128 = vst.msk [vmem:[#allocation5] sm:$0xff] %vm127, %v119
    %129 = vst.msk [vmem:[#allocation5 + $0x8] sm:$0xff] %vm127, %v124
    // Predicated region
    $region14: #{tpu_custom_call.1} parent=1 // pred_check
      _
    $region15: #{tpu_custom_call.1} parent=1 // pred_check_branch
      %131 = sbr.rel (0) target = $region17
    $region16: #{tpu_custom_call.1} parent=1 // pred_region
      %s133 = ssub.s32 256, 256
      %134 = vsyncadd [#allocation4], %s133
      %s135 = sshll.u32 [#allocation5], 4
      %s136 = int_to_ptr.vmem [resolvable:$true] %s135
      %141 = dma.vmem_to_hbm [thread:$0]  %s136, 256, %s2, [#allocation4], 128, 128, 8
    $region17: #{tpu_custom_call.1} parent=1 // pred_fallthru
      _
    // Predicated region
    $region18: #{tpu_custom_call.1} parent=1 // pred_check
      _
    $region19: #{tpu_custom_call.1} parent=1 // pred_check_branch
      %143 = sbr.rel (0) target = $region21
    $region20: #{tpu_custom_call.1} parent=1 // pred_region
      %144 = dma.done [#allocation4], 256
    $region21: #{tpu_custom_call.1} parent=1 // pred_fallthru
      _
    %145 = vsyncpa [#allocation3], 1
    %146 = vsyncpa [#allocation4], 1

</llo_original>
